<compile_context>
chip_gen: v5e
topology: v5e:2x2
jax: 0.10.0
libtpu: 0.0.40
codegen_flags: <defaults>
</compile_context>

<pallas_src>
import jax
import jax.numpy as jnp
from jax.experimental import pallas as pl
from jax.experimental.pallas import tpu as pltpu

_LANES = 128
_SUBLANES = 8
_MAX_ROW_TILE = 2048  # 2048 rows x 128 lanes x 4B = 1 MiB per (R,128) f32 plane


def xor_mlp_kernel(params_ref, x_ref, o_ref):
    # params_ref: SMEM f32[9] =
    #   [w1_00, w1_01, w1_10, w1_11, b1_0, b1_1, w2_00, w2_01, b2_0]
    w1_00 = params_ref[0]
    w1_01 = params_ref[1]
    w1_10 = params_ref[2]
    w1_11 = params_ref[3]
    b1_0 = params_ref[4]
    b1_1 = params_ref[5]
    w2_00 = params_ref[6]
    w2_01 = params_ref[7]
    b2_0 = params_ref[8]

    # x_ref: VMEM (2, R_TILE, 128); batch folded onto rows (sublanes) x lanes,
    # so x0/x1 are fully dense (R_TILE, 128) tiles.
    x0 = x_ref[0]
    x1 = x_ref[1]

    # Layer 1: two hidden channels, each a 2-wide contraction done on the VPU;
    # sigmoid (exp + reciprocal) runs on the EUP.
    h0 = jax.nn.sigmoid(w1_00 * x0 + w1_01 * x1 + b1_0)
    h1 = jax.nn.sigmoid(w1_10 * x0 + w1_11 * x1 + b1_1)

    # Layer 2: single output channel.
    y = jax.nn.sigmoid(w2_00 * h0 + w2_01 * h1 + b2_0)

    # o_ref: VMEM (R_TILE, 128) -> lane- and sublane-dense, unmasked store.
    o_ref[...] = y.astype(o_ref.dtype)


def xor_model_forward(x, w1, b1, w2, b2):
    """x: (B, 2). w1: (2, 2), b1: (2,), w2: (1, 2), b2: (1,) -- PyTorch
    nn.Linear parameter shapes (out_features, in_features). Returns (B, 1)."""
    x = jnp.asarray(x, jnp.float32)
    B = x.shape[0]

    # Pack all parameters into one small SMEM-resident array (single DMA).
    params = jnp.concatenate([
        jnp.asarray(w1, jnp.float32).reshape(-1),  # w1_00 w1_01 w1_10 w1_11
        jnp.asarray(b1, jnp.float32).reshape(-1),  # b1_0 b1_1
        jnp.asarray(w2, jnp.float32).reshape(-1),  # w2_00 w2_01
        jnp.asarray(b2, jnp.float32).reshape(-1),  # b2_0
    ])  # (9,) float32

    # Fold the batch onto rows (sublanes) x lanes: (2, R, 128).
    rows_needed = pl.cdiv(B, _LANES)
    if rows_needed <= _MAX_ROW_TILE:
        # Single grid step with the smallest legal (multiple-of-8) row count.
        r_tile = max(_SUBLANES, ((rows_needed + _SUBLANES - 1) // _SUBLANES) * _SUBLANES)
    else:
        # Large batch: multi-MiB tiles, >=2 grid steps (feeds both v7x TCs).
        r_tile = _MAX_ROW_TILE
    rows = ((rows_needed + r_tile - 1) // r_tile) * r_tile
    b_pad = rows * _LANES
    num_steps = rows // r_tile

    # TODO(synk): the pad+transpose below is a separate XLA op that re-reads x;
    # in production accept feature-major (2, B) input from the producer instead.
    x_t = (jnp.zeros((2, b_pad), jnp.float32)
           .at[:, :B].set(x.T)
           .reshape(2, rows, _LANES))

    out = pl.pallas_call(
        xor_mlp_kernel,
        out_shape=jax.ShapeDtypeStruct((rows, _LANES), jnp.float32),
        grid=(num_steps,),
        in_specs=[
            pl.BlockSpec(memory_space=pltpu.MemorySpace.SMEM),          # params
            pl.BlockSpec((2, r_tile, _LANES), lambda i: (0, i, 0)),      # x
        ],
        out_specs=pl.BlockSpec((r_tile, _LANES), lambda i: (i, 0)),      # y
        compiler_params=pltpu.CompilerParams(
            dimension_semantics=("parallel",),  # shards steps across TCs on v7x
        ),
        cost_estimate=pl.CostEstimate(
            flops=12 * b_pad,             # 3 channels x (2 mul + 2 add) per elem
            transcendentals=6 * b_pad,    # 3 sigmoids x (exp + rcp) per elem
            bytes_accessed=(3 * b_pad + 9) * 4,
        ),
    )(params, x_t)

    # Strip padding and restore the PyTorch (B, 1) output layout.
    return out.reshape(b_pad)[:B].reshape(B, 1)


def _torch_like_linear_init(key, out_features, in_features):
    # Deterministic analogue of PyTorch's default nn.Linear init:
    # U(-1/sqrt(in_features), +1/sqrt(in_features)) for weight and bias.
    bound = 1.0 / (in_features ** 0.5)
    kw, kb = jax.random.split(key)
    w = jax.random.uniform(kw, (out_features, in_features),
                           minval=-bound, maxval=bound, dtype=jnp.float32)
    b = jax.random.uniform(kb, (out_features,),
                           minval=-bound, maxval=bound, dtype=jnp.float32)
    return w, b


if __name__ == "__main__":
    key = jax.random.PRNGKey(0)
    k_x, k_x2, k_l1, k_l2 = jax.random.split(key, 4)

    # Parameters (PyTorch nn.Linear shapes): layer1 (2,2)/(2,), layer2 (1,2)/(1,)
    w1, b1 = _torch_like_linear_init(k_l1, 2, 2)
    w2, b2 = _torch_like_linear_init(k_l2, 1, 2)

    # Small batch of XOR-style inputs, shape (8, 2).
    B = 8
    x = jax.random.uniform(k_x, (B, 2), dtype=jnp.float32)
    out = jax.block_until_ready(xor_model_forward(x, w1, b1, w2, b2))
    ref = jax.nn.sigmoid(jax.nn.sigmoid(x @ w1.T + b1) @ w2.T + b2)
    assert out.shape == (B, 1), out.shape
    assert jnp.allclose(out, ref, atol=1e-6), "mismatch vs reference (B=8)"

    # Second check with a ragged batch to exercise padding/stripping (B=300).
    B2 = 300
    x2 = jax.random.uniform(k_x2, (B2, 2), dtype=jnp.float32)
    out2 = jax.block_until_ready(xor_model_forward(x2, w1, b1, w2, b2))
    ref2 = jax.nn.sigmoid(jax.nn.sigmoid(x2 @ w1.T + b1) @ w2.T + b2)
    assert out2.shape == (B2, 1), out2.shape
    assert jnp.allclose(out2, ref2, atol=1e-6), "mismatch vs reference (B=300)"

    print("KERNEL_OK")
</pallas_src>

<mosaic_0001>
module attributes {stable_mosaic.version = 11 : i64} {
  func.func @xor_mlp_kernel(%arg0: i32, %arg1: memref<9xf32, #tpu.memory_space<smem>>, %arg2: memref<2x8x128xf32, #tpu.memory_space<vmem>>, %arg3: memref<8x128xf32, #tpu.memory_space<vmem>>) attributes {dimension_semantics = [#tpu.dimension_semantics<parallel>], iteration_bounds = array<i64: 1>, scalar_prefetch = 0 : i64, scratch_operands = 0 : i64, tpu.core_type = #tpu.core_type<tc>, window_params = [{transform_indices = @transform_0, window_bounds = array<i64: 9>}, {transform_indices = @transform_1, window_bounds = array<i64: 2, 8, 128>}, {transform_indices = @transform_2, window_bounds = array<i64: 8, 128>}]} {
    %c0 = arith.constant 0 : index
    %0 = memref.load %arg1[%c0] : memref<9xf32, #tpu.memory_space<smem>>
    %c1 = arith.constant 1 : index
    %1 = memref.load %arg1[%c1] : memref<9xf32, #tpu.memory_space<smem>>
    %c2 = arith.constant 2 : index
    %2 = memref.load %arg1[%c2] : memref<9xf32, #tpu.memory_space<smem>>
    %c3 = arith.constant 3 : index
    %3 = memref.load %arg1[%c3] : memref<9xf32, #tpu.memory_space<smem>>
    %c4 = arith.constant 4 : index
    %4 = memref.load %arg1[%c4] : memref<9xf32, #tpu.memory_space<smem>>
    %c5 = arith.constant 5 : index
    %5 = memref.load %arg1[%c5] : memref<9xf32, #tpu.memory_space<smem>>
    %c6 = arith.constant 6 : index
    %6 = memref.load %arg1[%c6] : memref<9xf32, #tpu.memory_space<smem>>
    %c7 = arith.constant 7 : index
    %7 = memref.load %arg1[%c7] : memref<9xf32, #tpu.memory_space<smem>>
    %c8 = arith.constant 8 : index
    %8 = memref.load %arg1[%c8] : memref<9xf32, #tpu.memory_space<smem>>
    %c0_0 = arith.constant 0 : index
    %c0_1 = arith.constant 0 : index
    %c0_2 = arith.constant 0 : index
    %9 = vector.load %arg2[%c0_0, %c0_1, %c0_2] : memref<2x8x128xf32, #tpu.memory_space<vmem>>, vector<1x8x128xf32>
    %10 = vector.shape_cast %9 : vector<1x8x128xf32> to vector<8x128xf32>
    %c1_3 = arith.constant 1 : index
    %c0_4 = arith.constant 0 : index
    %c0_5 = arith.constant 0 : index
    %11 = vector.load %arg2[%c1_3, %c0_4, %c0_5] : memref<2x8x128xf32, #tpu.memory_space<vmem>>, vector<1x8x128xf32>
    %12 = vector.shape_cast %11 : vector<1x8x128xf32> to vector<8x128xf32>
    %13 = vector.broadcast %0 : f32 to vector<8x128xf32>
    %14 = arith.mulf %13, %10 : vector<8x128xf32>
    %15 = vector.broadcast %1 : f32 to vector<8x128xf32>
    %16 = arith.mulf %15, %12 : vector<8x128xf32>
    %17 = arith.addf %14, %16 : vector<8x128xf32>
    %18 = vector.broadcast %4 : f32 to vector<8x128xf32>
    %19 = arith.addf %17, %18 : vector<8x128xf32>
    %20 = arith.negf %19 : vector<8x128xf32>
    %21 = math.exp %20 : vector<8x128xf32>
    %cst = arith.constant 1.000000e+00 : f32
    %22 = vector.broadcast %cst : f32 to vector<8x128xf32>
    %23 = arith.addf %22, %21 : vector<8x128xf32>
    %24 = arith.divf %22, %23 : vector<8x128xf32>
    %25 = vector.broadcast %2 : f32 to vector<8x128xf32>
    %26 = arith.mulf %25, %10 : vector<8x128xf32>
    %27 = vector.broadcast %3 : f32 to vector<8x128xf32>
    %28 = arith.mulf %27, %12 : vector<8x128xf32>
    %29 = arith.addf %26, %28 : vector<8x128xf32>
    %30 = vector.broadcast %5 : f32 to vector<8x128xf32>
    %31 = arith.addf %29, %30 : vector<8x128xf32>
    %32 = arith.negf %31 : vector<8x128xf32>
    %33 = math.exp %32 : vector<8x128xf32>
    %cst_6 = arith.constant 1.000000e+00 : f32
    %34 = vector.broadcast %cst_6 : f32 to vector<8x128xf32>
    %35 = arith.addf %34, %33 : vector<8x128xf32>
    %36 = arith.divf %34, %35 : vector<8x128xf32>
    %37 = vector.broadcast %6 : f32 to vector<8x128xf32>
    %38 = arith.mulf %37, %24 : vector<8x128xf32>
    %39 = vector.broadcast %7 : f32 to vector<8x128xf32>
    %40 = arith.mulf %39, %36 : vector<8x128xf32>
    %41 = arith.addf %38, %40 : vector<8x128xf32>
    %42 = vector.broadcast %8 : f32 to vector<8x128xf32>
    %43 = arith.addf %41, %42 : vector<8x128xf32>
    %44 = arith.negf %43 : vector<8x128xf32>
    %45 = math.exp %44 : vector<8x128xf32>
    %cst_7 = arith.constant 1.000000e+00 : f32
    %46 = vector.broadcast %cst_7 : f32 to vector<8x128xf32>
    %47 = arith.addf %46, %45 : vector<8x128xf32>
    %48 = arith.divf %46, %47 : vector<8x128xf32>
    %c0_8 = arith.constant 0 : index
    %c0_9 = arith.constant 0 : index
    %49 = vector.load %arg3[%c0_8, %c0_9] : memref<8x128xf32, #tpu.memory_space<vmem>>, vector<8x128xf32>
    tpu.vector_store %arg3[%c0_8, %c0_9], %48 {strides = array<i32>} : memref<8x128xf32, #tpu.memory_space<vmem>>, vector<8x128xf32>,
    return
  }
  func.func @transform_0(%arg0: i32) -> i32 {
    %c0_i32 = arith.constant 0 : i32
    %c0_i32_0 = arith.constant 0 : i32
    return %c0_i32 : i32
  }
  func.func @transform_1(%arg0: i32) -> (i32, i32, i32) {
    %c0_i32 = arith.constant 0 : i32
    %c0_i32_0 = arith.constant 0 : i32
    %c0_i32_1 = arith.constant 0 : i32
    return %c0_i32, %arg0, %c0_i32_0 : i32, i32, i32
  }
  func.func @transform_2(%arg0: i32) -> (i32, i32) {
    %c0_i32 = arith.constant 0 : i32
    %c0_i32_0 = arith.constant 0 : i32
    return %arg0, %c0_i32 : i32, i32
  }
}

</mosaic_0001>

<llo_original>
// kernel: tpu_custom_call.1
$region0: #{tpu_custom_call.1}
  #allocation0 [shape = 'u32[]', space=smem, size = 0x4, offset = 0x4, fixed_abs, tag = 'smem constant byte address 0x4 - core index']
  #allocation1 [shape = 'u32[72,128]{1,0:T(1,128)}', space=vmem, size = 0x9000, scoped, tag = 'internal scratch']
  %s0 = inlined_call_operand.hbm [shape: f32[9], index: 0, kind: input, shape index: {}]
  %s1 = inlined_call_operand.hbm [shape: f32[2,8,128], index: 1, kind: input, shape index: {}]
  %s2 = inlined_call_operand.hbm [shape: f32[8,128], index: 2, kind: output, shape index: {}]
  %s3 = sld [smem:[#allocation0]]
  $region26: #{tpu_custom_call.1} parent=0
    _
  %s5 = ssub.s32 1, %s3
  %s6 = scalar_select 0, %s5, %s3
  $region1: #{tpu_custom_call.1} parent=0
    #allocation2 [shape = 'u8[512]{0}', space=smem, size = 0x200, scoped, tag = 'input window, operand 0, single buffered']
    #allocation3 [shape = 's32[1]{0}', space=sflag, size = 0x4, scoped, tag = 'scoped memory for tpu_custom_call.1']
    #allocation4 [shape = 's32[1]{0}', space=sflag, size = 0x4, scoped, tag = 'scoped memory for tpu_custom_call.1']
    #allocation5 [shape = 's32[1]{0}', space=sflag, size = 0x4, scoped, tag = 'scoped memory for tpu_custom_call.1']
    #allocation6 [shape = 'u8[8192]{0}', space=vmem, size = 0x2000, scoped, tag = 'input window, operand 1, single buffered']
    #allocation7 [shape = 'u8[4096]{0}', space=vmem, size = 0x1000, scoped, tag = 'output window, operand 0, single buffered']
    %7 = vsyncpa [#allocation5], 0
    %8 = vsyncpa [#allocation3], 0
    %9 = vsyncpa [#allocation4], 0
    // Predicated region
    $region2: #{tpu_custom_call.1} parent=1 // pred_check
      _
    $region3: #{tpu_custom_call.1} parent=1 // pred_check_branch
      %11 = sbr.rel (0) target = $region5
    $region4: #{tpu_custom_call.1} parent=1 // pred_region
      %13 = vsyncadd [#allocation5], 0
      %s15 = sshll.u32 %s0, 4
      %s16 = int_to_ptr.hbm [resolvable:$true] %s15
      %18 = dma.hbm_to_smem %s16, 16, [#allocation2], [#allocation5]
    $region5: #{tpu_custom_call.1} parent=1 // pred_fallthru
      _
    // Predicated region
    $region6: #{tpu_custom_call.1} parent=1 // pred_check
      _
    $region7: #{tpu_custom_call.1} parent=1 // pred_check_branch
      %20 = sbr.rel (0) target = $region9
    $region8: #{tpu_custom_call.1} parent=1 // pred_region
      %22 = vsyncadd [#allocation3], 0
      %s23 = sshll.u32 %s1, 4
      %s24 = int_to_ptr.hbm [resolvable:$true] %s23
      %s25 = sshll.u32 [#allocation6], 4
      %s26 = int_to_ptr.vmem [resolvable:$true] %s25
      %31 = dma.hbm_to_vmem [thread:$0]  %s24, 256, %s26, [#allocation3], 128, 128, 8
    $region9: #{tpu_custom_call.1} parent=1 // pred_fallthru
      _
    // Predicated region
    $region10: #{tpu_custom_call.1} parent=1 // pred_check
      _
    $region11: #{tpu_custom_call.1} parent=1 // pred_check_branch
      %33 = sbr.rel (0) target = $region13
    $region12: #{tpu_custom_call.1} parent=1 // pred_region
      %35 = dma.done [#allocation5], 16
    $region13: #{tpu_custom_call.1} parent=1 // pred_fallthru
      _
    // Predicated region
    $region14: #{tpu_custom_call.1} parent=1 // pred_check
      _
    $region15: #{tpu_custom_call.1} parent=1 // pred_check_branch
      %37 = sbr.rel (0) target = $region17
    $region16: #{tpu_custom_call.1} parent=1 // pred_region
      %39 = dma.done [#allocation3], 256
    $region17: #{tpu_custom_call.1} parent=1 // pred_fallthru
      _
    %40 = sfence
    %s41 = sld [smem:[#allocation2]]
    %s42 = sld [smem:[#allocation2 + $0x1]]
    %s43 = sld [smem:[#allocation2 + $0x2]]
    %s44 = sld [smem:[#allocation2 + $0x3]]
    %s45 = sld [smem:[#allocation2 + $0x4]]
    %s46 = sld [smem:[#allocation2 + $0x5]]
    %s47 = sld [smem:[#allocation2 + $0x6]]
    %s48 = sld [smem:[#allocation2 + $0x7]]
    %s49 = sld [smem:[#allocation2 + $0x8]]
    %v50 = vld [vmem:[#allocation6] sm:$0xff]
    %s51 = scalar_lea.vmem [#allocation6], 8
    %v52 = vld [vmem:[%s51] sm:$0xff]
    %v53 = vstv %s41
    %v54 = vmul.f32 %v53, %v50
    %v55 = vstv %s42
    %v56 = vmul.f32 %v55, %v52
    %v57 = vadd.f32 %v54, %v56
    %v58 = vstv %s45
    %v59 = vadd.f32 %v57, %v58
    %v60 = vxor.u32 %v59, 2147483648
    %v61 = vmul.f32 %v60, 1.442695
    %v62 = vpow.pop %v61
    %v63 = vadd.f32 %v62, 1.0
    %v64 = vrcp.pop %v63
    %v65 = vmul.f32 %v63, %v64
    %v66 = vsub.f32 1.0, %v65
    %v67 = vmul.f32 %v64, %v66
    %v68 = vadd.f32 %v64, %v67
    %vm69 = vweird.f32 %v63
    %vm70 = vweird.f32 %v64
    %vm71 = vmor %vm69, %vm70
    %v72 = vsel %vm71, %v64, %v68
    %v73 = vand.u32 2147483647, %v63
    %vm74 = vcmp.eq.f32.partialorder %v73, 8.507059e+37
    %v75 = vand.u32 %v63, 2147483648
    %v76 = vor.u32 1.1754944e-38, %v75
    %v77 = vsel %vm74, %v76, %v72
    %v78 = vmul.f32 1.0, %v77
    %v79 = vstv %s43
    %v80 = vmul.f32 %v79, %v50
    %v81 = vstv %s44
    %v82 = vmul.f32 %v81, %v52
    %v83 = vadd.f32 %v80, %v82
    %v84 = vstv %s46
    %v85 = vadd.f32 %v83, %v84
    %v86 = vxor.u32 %v85, 2147483648
    %v87 = vmul.f32 %v86, 1.442695
    %v88 = vpow.pop %v87
    %v89 = vadd.f32 %v88, 1.0
    %v90 = vrcp.pop %v89
    %v91 = vmul.f32 %v89, %v90
    %v92 = vsub.f32 1.0, %v91
    %v93 = vmul.f32 %v90, %v92
    %v94 = vadd.f32 %v90, %v93
    %vm95 = vweird.f32 %v89
    %vm96 = vweird.f32 %v90
    %vm97 = vmor %vm95, %vm96
    %v98 = vsel %vm97, %v90, %v94
    %v99 = vand.u32 2147483647, %v89
    %vm100 = vcmp.eq.f32.partialorder %v99, 8.507059e+37
    %v101 = vand.u32 %v89, 2147483648
    %v102 = vor.u32 1.1754944e-38, %v101
    %v103 = vsel %vm100, %v102, %v98
    %v104 = vmul.f32 1.0, %v103
    %v105 = vstv %s47
    %v106 = vmul.f32 %v105, %v78
    %v107 = vstv %s48
    %v108 = vmul.f32 %v107, %v104
    %v109 = vadd.f32 %v106, %v108
    %v110 = vstv %s49
    %v111 = vadd.f32 %v109, %v110
    %v112 = vxor.u32 %v111, 2147483648
    %v113 = vmul.f32 %v112, 1.442695
    %v114 = vpow.pop %v113
    %v115 = vadd.f32 %v114, 1.0
    %v116 = vrcp.pop %v115
    %v117 = vmul.f32 %v115, %v116
    %v118 = vsub.f32 1.0, %v117
    %v119 = vmul.f32 %v116, %v118
    %v120 = vadd.f32 %v116, %v119
    %vm121 = vweird.f32 %v115
    %vm122 = vweird.f32 %v116
    %vm123 = vmor %vm121, %vm122
    %v124 = vsel %vm123, %v116, %v120
    %v125 = vand.u32 2147483647, %v115
    %vm126 = vcmp.eq.f32.partialorder %v125, 8.507059e+37
    %v127 = vand.u32 %v115, 2147483648
    %v128 = vor.u32 1.1754944e-38, %v127
    %v129 = vsel %vm126, %v128, %v124
    %v130 = vmul.f32 1.0, %v129
    %131 = vst [vmem:[#allocation7] sm:$0xff] %v130
    // Predicated region
    $region18: #{tpu_custom_call.1} parent=1 // pred_check
      _
    $region19: #{tpu_custom_call.1} parent=1 // pred_check_branch
      %133 = sbr.rel (0) target = $region21
    $region20: #{tpu_custom_call.1} parent=1 // pred_region
      %135 = vsyncadd [#allocation4], 0
      %s137 = sshll.u32 [#allocation7], 4
      %s138 = int_to_ptr.vmem [resolvable:$true] %s137
      %s139 = sshll.u32 %s2, 4
      %s140 = int_to_ptr.hbm [resolvable:$true] %s139
      %142 = dma.vmem_to_hbm [thread:$0]  %s138, 128, %s140, [#allocation4]
    $region21: #{tpu_custom_call.1} parent=1 // pred_fallthru
      _
    // Predicated region
    $region22: #{tpu_custom_call.1} parent=1 // pred_check
      _
    $region23: #{tpu_custom_call.1} parent=1 // pred_check_branch
      %144 = sbr.rel (0) target = $region25
    $region24: #{tpu_custom_call.1} parent=1 // pred_region
      %146 = dma.done [#allocation4], 128
    $region25: #{tpu_custom_call.1} parent=1 // pred_fallthru
      _
    %147 = vsyncpa [#allocation3], 1
    %148 = vsyncpa [#allocation4], 1
    %149 = vsyncpa [#allocation5], 1

</llo_original>
